<compile_context>
chip_gen: v7x
topology: tpu7x:2x2x1
jax: 0.10.0
libtpu: 0.0.40
codegen_flags: <defaults>
</compile_context>

<pallas_src>
import jax
import jax.numpy as jnp
from jax.experimental import pallas as pl
from jax.experimental.pallas import tpu as pltpu


def _chan_ln_kernel(x_ref, gamma_ref, beta_ref, o_ref):
    # x_ref / o_ref: (Bt, C, TL);  gamma_ref / beta_ref: (C, 1)
    x = x_ref[...].astype(jnp.float32)                       # (Bt, C, TL)

    mean = jnp.mean(x, axis=1, keepdims=True)                # (Bt, 1, TL)
    diff = x - mean                                          # (Bt, C, TL)
    var = jnp.mean(diff * diff, axis=1, keepdims=True)       # unbiased=False

    # eps is added to the std (sqrt(var) + 1e-6), matching the PyTorch module.
    # Exact reciprocal: kernel is HBM-bound, precision matters more than the
    # (hidden-anyway) EUP latency of a full-precision 1/x.
    inv = 1.0 / (jnp.sqrt(var) + 1e-6)                       # (Bt, 1, TL)

    gamma = gamma_ref[...].astype(jnp.float32)[None]         # (1, C, 1)
    beta = beta_ref[...].astype(jnp.float32)[None]           # (1, C, 1)

    out = diff * (inv * gamma) + beta                        # (Bt, C, TL)
    o_ref[...] = out.astype(o_ref.dtype)


def _choose_tiles(B, C, L, lane_tile_cap=2048):
    """Pick (Bt, TL) block sizes.

    TL must be a multiple of 128 or equal to L (Mosaic (8,128) block rule).
    Budget keeps a single x tile around <= ~1 MiB so the double-buffered
    input + output tiles stay far below scoped VMEM on every generation
    (16 MiB v5e, 32 MiB v6e/v7x scoped; 64 MiB physical on v7x).
    """
    if L % 128 == 0 and L >= 128:
        budget_bytes = 1 << 20                               # per x tile (f32)
        cap_from_vmem = max(128, (budget_bytes // (C * 4)) // 128 * 128)
        cap = min(L, lane_tile_cap, cap_from_vmem)
        tl = 128
        for cand in range(cap, 0, -128):
            if L % cand == 0:
                tl = cand
                break
        return 1, tl
    # Lane-sparse L (L < 128 or not a multiple of 128): block must span full L.
    # Pack batch elements per block to amortize per-step overhead / fill vregs.
    bt = 1
    for cand in (8, 4, 2):
        if B % cand == 0:
            bt = cand
            break
    while bt > 1 and bt * C * L * 4 > (1 << 20):
        bt //= 2
    return bt, L


def chan_layer_norm_1d(x, gamma, beta):
    """x: (B, C, L); gamma, beta: (1, C, 1). Returns (B, C, L)."""
    B, C, L = x.shape
    g2 = gamma.reshape(C, 1)
    b2 = beta.reshape(C, 1)

    bt, tl = _choose_tiles(B, C, L)
    grid = (B // bt, L // tl)

    return pl.pallas_call(
        _chan_ln_kernel,
        out_shape=jax.ShapeDtypeStruct((B, C, L), x.dtype),
        grid_spec=pltpu.PrefetchScalarGridSpec(
            num_scalar_prefetch=0,
            grid=grid,
            in_specs=[
                pl.BlockSpec((bt, C, tl), lambda b, l: (b, 0, l)),
                # Constant index_map -> gamma/beta stay resident (no per-step DMA).
                pl.BlockSpec((C, 1), lambda b, l: (0, 0)),
                pl.BlockSpec((C, 1), lambda b, l: (0, 0)),
            ],
            out_specs=pl.BlockSpec((bt, C, tl), lambda b, l: (b, 0, l)),
        ),
        compiler_params=pltpu.CompilerParams(
            # Both axes independent -> shard across v7x's 2 TensorCores.
            dimension_semantics=("parallel", "parallel"),
        ),
    )(x, g2, b2)


def _reference(x, gamma, beta):
    x32 = x.astype(jnp.float32)
    mean = jnp.mean(x32, axis=1, keepdims=True)
    var = jnp.mean((x32 - mean) ** 2, axis=1, keepdims=True)
    return (gamma * (x32 - mean) / (jnp.sqrt(var) + 1e-6) + beta).astype(x.dtype)


if __name__ == "__main__":
    # Small shape implied by the module: batch=2, channels=4, length=16.
    B, C, L = 2, 4, 16
    x = jax.random.normal(jax.random.PRNGKey(0), (B, C, L), dtype=jnp.float32)
    gamma = jnp.ones((1, C, 1), dtype=jnp.float32)   # nn.Parameter(torch.ones)
    beta = jnp.zeros((1, C, 1), dtype=jnp.float32)   # nn.Parameter(torch.zeros)

    out = jax.block_until_ready(chan_layer_norm_1d(x, gamma, beta))
    ref = _reference(x, gamma, beta)
    assert out.shape == (B, C, L)
    assert jnp.allclose(out, ref, atol=1e-5, rtol=1e-5), "mismatch vs reference"

    # Also exercise the lane-dense L-tiled path (L % 128 == 0, nontrivial gamma/beta).
    B2, C2, L2 = 2, 8, 256
    x2 = jax.random.normal(jax.random.PRNGKey(1), (B2, C2, L2), dtype=jnp.float32)
    g2 = 0.5 + jax.random.uniform(jax.random.PRNGKey(2), (1, C2, 1), dtype=jnp.float32)
    b2 = 0.1 * jax.random.normal(jax.random.PRNGKey(3), (1, C2, 1), dtype=jnp.float32)
    out2 = jax.block_until_ready(chan_layer_norm_1d(x2, g2, b2))
    ref2 = _reference(x2, g2, b2)
    assert jnp.allclose(out2, ref2, atol=1e-5, rtol=1e-5), "mismatch vs reference (tiled)"

    print("KERNEL_OK")
</pallas_src>

<mosaic_0001>
module attributes {stable_mosaic.version = 11 : i64} {
  func.func @_chan_ln_kernel(%arg0: i32, %arg1: i32, %arg2: memref<2x4x16xf32, #tpu.memory_space<vmem>>, %arg3: memref<4x1xf32, #tpu.memory_space<vmem>>, %arg4: memref<4x1xf32, #tpu.memory_space<vmem>>, %arg5: memref<2x4x16xf32, #tpu.memory_space<vmem>>) attributes {dimension_semantics = [#tpu.dimension_semantics<parallel>, #tpu.dimension_semantics<parallel>], iteration_bounds = array<i64: 1, 1>, scalar_prefetch = 0 : i64, scratch_operands = 0 : i64, tpu.core_type = #tpu.core_type<tc>, window_params = [{transform_indices = @transform_0, window_bounds = array<i64: 2, 4, 16>}, {pipeline_mode = #tpu.pipeline_mode<synchronous>, transform_indices = @transform_1, window_bounds = array<i64: 4, 1>}, {pipeline_mode = #tpu.pipeline_mode<synchronous>, transform_indices = @transform_2, window_bounds = array<i64: 4, 1>}, {transform_indices = @transform_3, window_bounds = array<i64: 2, 4, 16>}]} {
    %c0 = arith.constant 0 : index
    %c0_0 = arith.constant 0 : index
    %c0_1 = arith.constant 0 : index
    %0 = vector.load %arg2[%c0, %c0_0, %c0_1] : memref<2x4x16xf32, #tpu.memory_space<vmem>>, vector<2x4x16xf32>
    %cst = arith.constant dense<0.000000e+00> : vector<2x16xf32>
    %1 = vector.multi_reduction <add>, %0, %cst [1] : vector<2x4x16xf32> to vector<2x16xf32>
    %2 = vector.shape_cast %1 : vector<2x16xf32> to vector<2x1x16xf32>
    %cst_2 = arith.constant 4.000000e+00 : f32
    %3 = vector.broadcast %cst_2 : f32 to vector<2x1x16xf32>
    %4 = arith.divf %2, %3 : vector<2x1x16xf32>
    %5 = vector.broadcast %4 : vector<2x1x16xf32> to vector<2x4x16xf32>
    %6 = arith.subf %0, %5 : vector<2x4x16xf32>
    %7 = arith.mulf %6, %6 : vector<2x4x16xf32>
    %cst_3 = arith.constant dense<0.000000e+00> : vector<2x16xf32>
    %8 = vector.multi_reduction <add>, %7, %cst_3 [1] : vector<2x4x16xf32> to vector<2x16xf32>
    %9 = vector.shape_cast %8 : vector<2x16xf32> to vector<2x1x16xf32>
    %cst_4 = arith.constant 4.000000e+00 : f32
    %10 = vector.broadcast %cst_4 : f32 to vector<2x1x16xf32>
    %11 = arith.divf %9, %10 : vector<2x1x16xf32>
    %12 = math.sqrt %11 : vector<2x1x16xf32>
    %cst_5 = arith.constant 9.99999997E-7 : f32
    %13 = vector.broadcast %cst_5 : f32 to vector<2x1x16xf32>
    %14 = arith.addf %12, %13 : vector<2x1x16xf32>
    %cst_6 = arith.constant 1.000000e+00 : f32
    %15 = vector.broadcast %cst_6 : f32 to vector<2x1x16xf32>
    %16 = arith.divf %15, %14 : vector<2x1x16xf32>
    %c0_7 = arith.constant 0 : index
    %c0_8 = arith.constant 0 : index
    %17 = vector.load %arg3[%c0_7, %c0_8] : memref<4x1xf32, #tpu.memory_space<vmem>>, vector<4x1xf32>
    %18 = vector.shape_cast %17 : vector<4x1xf32> to vector<1x4x1xf32>
    %c0_9 = arith.constant 0 : index
    %c0_10 = arith.constant 0 : index
    %19 = vector.load %arg4[%c0_9, %c0_10] : memref<4x1xf32, #tpu.memory_space<vmem>>, vector<4x1xf32>
    %20 = vector.shape_cast %19 : vector<4x1xf32> to vector<1x4x1xf32>
    %21 = vector.broadcast %16 : vector<2x1x16xf32> to vector<2x4x16xf32>
    %22 = vector.broadcast %18 : vector<1x4x1xf32> to vector<2x4x16xf32>
    %23 = arith.mulf %21, %22 : vector<2x4x16xf32>
    %24 = arith.mulf %6, %23 : vector<2x4x16xf32>
    %25 = vector.broadcast %20 : vector<1x4x1xf32> to vector<2x4x16xf32>
    %26 = arith.addf %24, %25 : vector<2x4x16xf32>
    %c0_11 = arith.constant 0 : index
    %c0_12 = arith.constant 0 : index
    %c0_13 = arith.constant 0 : index
    %27 = vector.load %arg5[%c0_11, %c0_12, %c0_13] : memref<2x4x16xf32, #tpu.memory_space<vmem>>, vector<2x4x16xf32>
    tpu.vector_store %arg5[%c0_11, %c0_12, %c0_13], %26 {strides = array<i32>} : memref<2x4x16xf32, #tpu.memory_space<vmem>>, vector<2x4x16xf32>,
    return
  }
  func.func @transform_0(%arg0: i32, %arg1: i32) -> (i32, i32, i32) {
    %c0_i32 = arith.constant 0 : i32
    %c0_i32_0 = arith.constant 0 : i32
    return %arg0, %c0_i32, %arg1 : i32, i32, i32
  }
  func.func @transform_1(%arg0: i32, %arg1: i32) -> (i32, i32) {
    %c0_i32 = arith.constant 0 : i32
    %c0_i32_0 = arith.constant 0 : i32
    %c0_i32_1 = arith.constant 0 : i32
    return %c0_i32, %c0_i32_0 : i32, i32
  }
  func.func @transform_2(%arg0: i32, %arg1: i32) -> (i32, i32) {
    %c0_i32 = arith.constant 0 : i32
    %c0_i32_0 = arith.constant 0 : i32
    %c0_i32_1 = arith.constant 0 : i32
    return %c0_i32, %c0_i32_0 : i32, i32
  }
  func.func @transform_3(%arg0: i32, %arg1: i32) -> (i32, i32, i32) {
    %c0_i32 = arith.constant 0 : i32
    %c0_i32_0 = arith.constant 0 : i32
    return %arg0, %c0_i32, %arg1 : i32, i32, i32
  }
}

</mosaic_0001>

<llo_original>
// kernel: tpu_custom_call.1
$region0: #{tpu_custom_call.1}
  #allocation0 [shape = 'u32[]', space=smem, size = 0x4, offset = 0x4, fixed_abs, tag = 'smem constant byte address 0x4 - core index']
  #allocation1 [shape = 'u32[144,128]{1,0:T(1,128)}', space=vmem, size = 0x12000, scoped, tag = 'internal scratch']
  %s0 = inlined_call_operand.vmem [shape: f32[2,4,16], index: 0, kind: input, shape index: {}]
  %s1 = inlined_call_operand.vmem [shape: f32[4,1], index: 1, kind: input, shape index: {}]
  %s2 = inlined_call_operand.vmem [shape: f32[4,1], index: 2, kind: input, shape index: {}]
  %s3 = inlined_call_operand.hbm [shape: f32[2,4,16], index: 3, kind: output, shape index: {}]
  %s4 = sld [smem:[#allocation0]]
  $region22: #{tpu_custom_call.1} parent=0
    _
  %s6 = ssub.s32 1, %s4
  %s7 = scalar_select 0, %s6, %s4
  $region1: #{tpu_custom_call.1} parent=0
    #allocation2 [shape = 'u8[4096]{0}', space=vmem, size = 0x1000, scoped, tag = 'output window, operand 0, single buffered']
    #allocation3 [shape = 's32[1]{0}', space=sflag, size = 0x4, scoped, tag = 'scoped memory for tpu_custom_call.1']
    %8 = vsyncpa [#allocation3], 0
    // Predicated region
    $region2: #{tpu_custom_call.1} parent=1 // pred_check
      _
    $region3: #{tpu_custom_call.1} parent=1 // pred_check_branch
      %10 = sbr.rel (0) target = $region5
    $region4: #{tpu_custom_call.1} parent=1 // pred_region
      _
    $region5: #{tpu_custom_call.1} parent=1 // pred_fallthru
      _
    // Predicated region
    $region6: #{tpu_custom_call.1} parent=1 // pred_check
      _
    $region7: #{tpu_custom_call.1} parent=1 // pred_check_branch
      %12 = sbr.rel (0) target = $region9
    $region8: #{tpu_custom_call.1} parent=1 // pred_region
      _
    $region9: #{tpu_custom_call.1} parent=1 // pred_fallthru
      _
    // Predicated region
    $region10: #{tpu_custom_call.1} parent=1 // pred_check
      _
    $region11: #{tpu_custom_call.1} parent=1 // pred_check_branch
      %14 = sbr.rel (0) target = $region13
    $region12: #{tpu_custom_call.1} parent=1 // pred_region
      _
    $region13: #{tpu_custom_call.1} parent=1 // pred_fallthru
      _
    %v15 = vld [vmem:[%s0] sm:$0xf]
    %v16 = vld [vmem:[%s0 + $0x4] sm:$0xf]
    %vm17 = vcmask 125952
    %v18 = vsel %vm17, %v15, 0.0
    %v19 = vrot.slane %v18, 4
    %v20 = vadd.f32 %v18, %v19
    %v21 = vrot.slane %v20, 2
    %v22 = vadd.f32 %v20, %v21
    %v23 = vrot.slane %v22, 1
    %v24 = vadd.f32 %v22, %v23
    %v25 = vsel %vm17, %v16, 0.0
    %v26 = vrot.slane %v25, 4
    %v27 = vadd.f32 %v25, %v26
    %v28 = vrot.slane %v27, 2
    %v29 = vadd.f32 %v27, %v28
    %v30 = vrot.slane %v29, 1
    %v31 = vadd.f32 %v29, %v30
    %v32 = vrcp.pop 4.0
    %v33 = vmul.f32 %v24, %v32
    %v34 = vmul.f32 %v31, %v32
    %v35 = vsub.f32 %v15, %v33
    %v36 = vsub.f32 %v16, %v34
    %v37 = vmul.f32 %v35, %v35
    %v38 = vmul.f32 %v36, %v36
    %v39 = vsel %vm17, %v37, 0.0
    %v40 = vrot.slane %v39, 4
    %v41 = vadd.f32 %v39, %v40
    %v42 = vrot.slane %v41, 2
    %v43 = vadd.f32 %v41, %v42
    %v44 = vrot.slane %v43, 1
    %v45 = vadd.f32 %v43, %v44
    %v46 = vsel %vm17, %v38, 0.0
    %v47 = vrot.slane %v46, 4
    %v48 = vadd.f32 %v46, %v47
    %v49 = vrot.slane %v48, 2
    %v50 = vadd.f32 %v48, %v49
    %v51 = vrot.slane %v50, 1
    %v52 = vadd.f32 %v50, %v51
    %v53 = vmul.f32 %v45, %v32
    %v54 = vmul.f32 %v52, %v32
    %v55 = vrsqrt.pop %v53
    %v56 = vmul.f32 %v53, %v55
    %vm57 = vcmp.eq.f32.partialorder %v53, inf
    %v58 = vsel %vm57, %v53, %v56
    %vm59 = vcmp.eq.f32.partialorder %v53, 0.0
    %v60 = vand.u32 %v53, 2147483648
    %v61 = vsel %vm59, %v60, %v58
    %v62 = vrsqrt.pop %v54
    %v63 = vmul.f32 %v54, %v62
    %vm64 = vcmp.eq.f32.partialorder %v54, inf
    %v65 = vsel %vm64, %v54, %v63
    %vm66 = vcmp.eq.f32.partialorder %v54, 0.0
    %v67 = vand.u32 %v54, 2147483648
    %v68 = vsel %vm66, %v67, %v65
    %v69 = vadd.f32 %v61, 1e-06
    %v70 = vadd.f32 %v68, 1e-06
    %v71 = vrcp.pop %v69
    %v72 = vmul.f32 1.0, %v71
    %v73 = vrcp.pop %v70
    %v74 = vmul.f32 1.0, %v73
    %v75 = vld [vmem:[%s1] sm:$0xf]
    %v76 = vld [vmem:[%s2] sm:$0xf]
    %78 = vset.pattern.permute.xlu0 0
    %79 = vperm.xlu0 %78, %v75
    %v80 = vpop.permute.xlu0 %79
    %v82 = vmul.f32 %v72, %v80
    %v83 = vmul.f32 %v74, %v80
    %v84 = vmul.f32 %v35, %v82
    %v85 = vmul.f32 %v36, %v83
    %87 = vset.pattern.permute.xlu0 0
    %88 = vperm.xlu0 %87, %v76
    %v89 = vpop.permute.xlu0 %88
    %v91 = vadd.f32 %v84, %v89
    %v92 = vadd.f32 %v85, %v89
    %93 = vst.msk [vmem:[#allocation2] sm:$0xf] %vm17, %v91
    %94 = vst.msk [vmem:[#allocation2 + $0x4] sm:$0xf] %vm17, %v92
    // Predicated region
    $region14: #{tpu_custom_call.1} parent=1 // pred_check
      _
    $region15: #{tpu_custom_call.1} parent=1 // pred_check_branch
      %96 = sbr.rel (0) target = $region17
    $region16: #{tpu_custom_call.1} parent=1 // pred_region
      %s98 = ssub.s32 128, 128
      %99 = vsyncadd [#allocation3], %s98
      %s100 = sshll.u32 [#allocation2], 4
      %s101 = int_to_ptr.vmem [resolvable:$true] %s100
      %106 = dma.vmem_to_hbm [thread:$0]  %s101, 128, %s3, [#allocation3], 64, 64, 4
    $region17: #{tpu_custom_call.1} parent=1 // pred_fallthru
      _
    // Predicated region
    $region18: #{tpu_custom_call.1} parent=1 // pred_check
      _
    $region19: #{tpu_custom_call.1} parent=1 // pred_check_branch
      %108 = sbr.rel (0) target = $region21
    $region20: #{tpu_custom_call.1} parent=1 // pred_region
      %109 = dma.done [#allocation3], 128
    $region21: #{tpu_custom_call.1} parent=1 // pred_fallthru
      _
    %110 = vsyncpa [#allocation3], 1

</llo_original>
